<compile_context>
chip_gen: v5e
topology: v5e:2x2
jax: 0.10.0
libtpu: 0.0.40
codegen_flags: <defaults>
</compile_context>

<pallas_src>
import jax
import jax.numpy as jnp
from jax.experimental import pallas as pl
from jax.experimental.pallas import tpu as pltpu

_BN_EPS = 1e-5
_LANE = 128


def _round_up(x, m):
    return ((x + m - 1) // m) * m


# ---------------------------------------------------------------------------
# Fused Pallas kernel: the whole BoxHead (all 3 branches, all layers) per tile.
#   refs = (x_ref, w_0, b_0, ..., w_{L-1}, b_{L-1}, o_ref)
#   hidden layers: h = relu(h @ w_l + b_l)   (Linear + folded BN + Dropout(id))
#   final layer  : out = h @ w_last + b_last (block-diagonal packed heads)
# ---------------------------------------------------------------------------
def _fused_head_kernel(*refs):
    x_ref, *wb_refs, o_ref = refs
    n_layers = len(wb_refs) // 2
    h = x_ref[...]
    for l in range(n_layers):
        w_ref = wb_refs[2 * l]
        b_ref = wb_refs[2 * l + 1]
        acc = jnp.dot(h.astype(w_ref.dtype), w_ref[...],
                      preferred_element_type=jnp.float32) + b_ref[...]
        if l < n_layers - 1:
            h = jnp.maximum(acc, 0.0)          # f32 epilogue (ReLU)
        else:
            o_ref[...] = acc.astype(o_ref.dtype)


def _batch_tile(n, f_in, itemsize):
    """Pick a large batch tile (multiple of 8) keeping the x buffer ~<=8 MiB."""
    per_row = max(1, f_in * itemsize)
    t = min(1024, max(8, (8 * 1024 * 1024) // per_row))
    t = max(8, (t // 8) * 8)
    return n if t >= n else t


def _fused_apply(x, layers, out_pad):
    n, f_in = x.shape
    tn = _batch_tile(n, f_in, jnp.dtype(x.dtype).itemsize)

    in_specs = [pl.BlockSpec((tn, f_in), lambda i: (i, 0))]
    args = [x]
    for w, b in layers:
        # Constant index_map -> weights/biases DMA'd once, VMEM-resident
        # across all batch-tile grid steps.
        in_specs.append(pl.BlockSpec(w.shape, lambda i: (0, 0)))
        in_specs.append(pl.BlockSpec(b.shape, lambda i: (0, 0)))
        args.append(w)
        args.append(b)

    return pl.pallas_call(
        _fused_head_kernel,
        out_shape=jax.ShapeDtypeStruct((n, out_pad), jnp.float32),
        grid=(pl.cdiv(n, tn),),
        in_specs=in_specs,
        out_specs=pl.BlockSpec((tn, out_pad), lambda i: (i, 0)),
        compiler_params=pltpu.CompilerParams(
            dimension_semantics=("parallel",)),
    )(*args)


# ---------------------------------------------------------------------------
# BoxHead module (parameters built deterministically in-script, torch-like init)
# ---------------------------------------------------------------------------
class BoxHeadPallas:
    def __init__(
        self,
        in_size,
        num_bins=2,
        dim_reg_hide_sizes=(128,),
        bin_conf_hide_sizes=(128,),
        bin_reg_hide_sizes=(128,),
        cos_sin_encode=False,
        compute_dtype=jnp.bfloat16,
        key=None,
    ):
        if not (len(dim_reg_hide_sizes) == len(bin_conf_hide_sizes)
                == len(bin_reg_hide_sizes)):
            # TODO(synk): unequal branch depths would need identity padding layers.
            raise ValueError("fused BoxHead requires equal branch depths")

        self.in_size = in_size
        self.num_bins = num_bins
        self.cos_sin_encode = cos_sin_encode
        self.compute_dtype = compute_dtype
        self._bin_reg_out = num_bins * 2 if cos_sin_encode else num_bins

        if key is None:
            key = jax.random.PRNGKey(0)
        k1, k2, k3 = jax.random.split(key, 3)
        branches = [
            self._init_branch(k1, dim_reg_hide_sizes, 3),
            self._init_branch(k2, bin_conf_hide_sizes, num_bins),
            self._init_branch(k3, bin_reg_hide_sizes, self._bin_reg_out),
        ]
        self.fused_layers = self._fuse(branches)

    def _init_branch(self, key, hidden_sizes, out_size):
        """Mirror _make_fc_layers + init_weights: W ~ N(0, 0.01), bias = 0.
        BatchNorm1d (eval, freshly-initialized: gamma=1, beta=0, mean=0, var=1)
        is folded into (W, bias) here; the fold is general, so trained
        running stats / affine params can be substituted below."""
        layers = []
        pre = self.in_size
        for h in hidden_sizes:
            key, sub = jax.random.split(key)
            w = 0.01 * jax.random.normal(sub, (pre, h), jnp.float32)
            gamma = jnp.ones((h,), jnp.float32)
            beta = jnp.zeros((h,), jnp.float32)
            r_mean = jnp.zeros((h,), jnp.float32)
            r_var = jnp.ones((h,), jnp.float32)
            scale = gamma / jnp.sqrt(r_var + _BN_EPS)
            w_folded = w * scale[None, :]
            b_folded = beta - r_mean * scale
            layers.append((w_folded, b_folded))
            pre = h
        key, sub = jax.random.split(key)
        w_last = 0.01 * jax.random.normal(sub, (pre, out_size), jnp.float32)
        b_last = jnp.zeros((out_size,), jnp.float32)
        layers.append((w_last, b_last))
        return layers

    def _fuse(self, branches):
        """Pack the three per-branch MLPs into one fused MLP:
        layer 0 concatenated along the output axis (shared input x), deeper
        layers block-diagonal; all widths zero-padded to multiples of 128."""
        n_layers = len(branches[0])
        fused = []
        prev_offsets = None               # per-branch column offset in prev layer
        prev_pad = self.in_size
        for l in range(n_layers):
            outs = [br[l][0].shape[1] for br in branches]
            total = sum(outs)
            pad = _round_up(total, _LANE)
            col_offs = []
            c = 0
            for o in outs:
                col_offs.append(c)
                c += o
            w_f = jnp.zeros((prev_pad, pad), jnp.float32)
            b_f = jnp.zeros((1, pad), jnp.float32)
            for bi, br in enumerate(branches):
                w, b = br[l]
                r0 = 0 if l == 0 else prev_offsets[bi]
                w_f = w_f.at[r0:r0 + w.shape[0],
                             col_offs[bi]:col_offs[bi] + w.shape[1]].set(w)
                b_f = b_f.at[0, col_offs[bi]:col_offs[bi] + b.shape[0]].set(b)
            # Weights in bf16 for the MXU; bias kept f32 for the epilogue.
            fused.append((w_f.astype(self.compute_dtype), b_f))
            prev_offsets = col_offs
            prev_pad = pad
        self._out_offsets = prev_offsets
        self._out_pad = prev_pad
        return fused

    def __call__(self, x):
        """x: (N, in_size) flattened backbone features.

        Returns (dim_reg (N,3), bin_conf (N,num_bins),
                 bin_reg (N,num_bins) or (N,num_bins,2) if cos_sin_encode)."""
        out = _fused_apply(x.astype(self.compute_dtype),
                           self.fused_layers, self._out_pad)
        o_dim, o_conf, o_reg = self._out_offsets
        dim_reg = out[:, o_dim:o_dim + 3]
        bin_conf = out[:, o_conf:o_conf + self.num_bins]
        bin_reg = out[:, o_reg:o_reg + self._bin_reg_out]
        if self.cos_sin_encode:
            bin_reg = bin_reg.reshape(-1, self.num_bins, 2)
        return dim_reg, bin_conf, bin_reg


# ---------------------------------------------------------------------------
# Demo / smoke test
# ---------------------------------------------------------------------------
if __name__ == "__main__":
    key = jax.random.PRNGKey(0)
    k_params, k_x = jax.random.split(key)

    # Small shapes: backbone gives 32 channels x 4 x 4 -> in_size = 512.
    N = 8
    in_size = 32 * 4 * 4  # 512

    head = BoxHeadPallas(
        in_size=in_size,
        num_bins=2,
        dim_reg_hide_sizes=(128,),
        bin_conf_hide_sizes=(128,),
        bin_reg_hide_sizes=(128,),
        cos_sin_encode=False,
        key=k_params,
    )

    x = jax.random.normal(k_x, (N, in_size), dtype=jnp.float32)

    dim_reg, bin_conf, bin_reg = head(x)
    jax.block_until_ready((dim_reg, bin_conf, bin_reg))

    assert dim_reg.shape == (N, 3)
    assert bin_conf.shape == (N, 2)
    assert bin_reg.shape == (N, 2)
    print("KERNEL_OK")
</pallas_src>

<mosaic_0001>
module attributes {stable_mosaic.version = 11 : i64} {
  func.func @_fused_head_kernel(%arg0: i32, %arg1: memref<8x512xbf16, #tpu.memory_space<vmem>>, %arg2: memref<512x384xbf16, #tpu.memory_space<vmem>>, %arg3: memref<1x384xf32, #tpu.memory_space<vmem>>, %arg4: memref<384x128xbf16, #tpu.memory_space<vmem>>, %arg5: memref<1x128xf32, #tpu.memory_space<vmem>>, %arg6: memref<8x128xf32, #tpu.memory_space<vmem>>) attributes {dimension_semantics = [#tpu.dimension_semantics<parallel>], iteration_bounds = array<i64: 1>, scalar_prefetch = 0 : i64, scratch_operands = 0 : i64, tpu.core_type = #tpu.core_type<tc>, window_params = [{transform_indices = @transform_0, window_bounds = array<i64: 8, 512>}, {pipeline_mode = #tpu.pipeline_mode<synchronous>, transform_indices = @transform_1, window_bounds = array<i64: 512, 384>}, {pipeline_mode = #tpu.pipeline_mode<synchronous>, transform_indices = @transform_2, window_bounds = array<i64: 1, 384>}, {pipeline_mode = #tpu.pipeline_mode<synchronous>, transform_indices = @transform_3, window_bounds = array<i64: 384, 128>}, {pipeline_mode = #tpu.pipeline_mode<synchronous>, transform_indices = @transform_4, window_bounds = array<i64: 1, 128>}, {transform_indices = @transform_5, window_bounds = array<i64: 8, 128>}]} {
    %c0 = arith.constant 0 : index
    %c0_0 = arith.constant 0 : index
    %0 = vector.load %arg1[%c0, %c0_0] : memref<8x512xbf16, #tpu.memory_space<vmem>>, vector<8x512xbf16>
    %c0_1 = arith.constant 0 : index
    %c0_2 = arith.constant 0 : index
    %1 = vector.load %arg2[%c0_1, %c0_2] : memref<512x384xbf16, #tpu.memory_space<vmem>>, vector<512x384xbf16>
    %cst = arith.constant dense<0.000000e+00> : vector<8x384xf32>
    %2 = tpu.matmul %0, %1, %cst {dimension_numbers = #tpu.dot_dimension_numbers<[1], [0], [0], [1], [0, 0, 1, 1], [], []>} : vector<8x512xbf16>, vector<512x384xbf16>, vector<8x384xf32> -> vector<8x384xf32>
    %c0_3 = arith.constant 0 : index
    %c0_4 = arith.constant 0 : index
    %3 = vector.load %arg3[%c0_3, %c0_4] : memref<1x384xf32, #tpu.memory_space<vmem>>, vector<1x384xf32>
    %4 = vector.broadcast %3 : vector<1x384xf32> to vector<8x384xf32>
    %5 = arith.addf %2, %4 : vector<8x384xf32>
    %cst_5 = arith.constant 0.000000e+00 : f32
    %6 = vector.broadcast %cst_5 : f32 to vector<8x384xf32>
    %7 = arith.maximumf %5, %6 : vector<8x384xf32>
    %8 = arith.truncf %7 : vector<8x384xf32> to vector<8x384xbf16>
    %c0_6 = arith.constant 0 : index
    %c0_7 = arith.constant 0 : index
    %9 = vector.load %arg4[%c0_6, %c0_7] : memref<384x128xbf16, #tpu.memory_space<vmem>>, vector<384x128xbf16>
    %cst_8 = arith.constant dense<0.000000e+00> : vector<8x128xf32>
    %10 = tpu.matmul %8, %9, %cst_8 {dimension_numbers = #tpu.dot_dimension_numbers<[1], [0], [0], [1], [0, 0, 1, 1], [], []>} : vector<8x384xbf16>, vector<384x128xbf16>, vector<8x128xf32> -> vector<8x128xf32>
    %c0_9 = arith.constant 0 : index
    %c0_10 = arith.constant 0 : index
    %11 = vector.load %arg5[%c0_9, %c0_10] : memref<1x128xf32, #tpu.memory_space<vmem>>, vector<1x128xf32>
    %12 = vector.broadcast %11 : vector<1x128xf32> to vector<8x128xf32>
    %13 = arith.addf %10, %12 : vector<8x128xf32>
    %c0_11 = arith.constant 0 : index
    %c0_12 = arith.constant 0 : index
    %14 = vector.load %arg6[%c0_11, %c0_12] : memref<8x128xf32, #tpu.memory_space<vmem>>, vector<8x128xf32>
    tpu.vector_store %arg6[%c0_11, %c0_12], %13 {strides = array<i32>} : memref<8x128xf32, #tpu.memory_space<vmem>>, vector<8x128xf32>,
    return
  }
  func.func @transform_0(%arg0: i32) -> (i32, i32) {
    %c0_i32 = arith.constant 0 : i32
    %c0_i32_0 = arith.constant 0 : i32
    return %arg0, %c0_i32 : i32, i32
  }
  func.func @transform_1(%arg0: i32) -> (i32, i32) {
    %c0_i32 = arith.constant 0 : i32
    %c0_i32_0 = arith.constant 0 : i32
    %c0_i32_1 = arith.constant 0 : i32
    return %c0_i32, %c0_i32_0 : i32, i32
  }
  func.func @transform_2(%arg0: i32) -> (i32, i32) {
    %c0_i32 = arith.constant 0 : i32
    %c0_i32_0 = arith.constant 0 : i32
    %c0_i32_1 = arith.constant 0 : i32
    return %c0_i32, %c0_i32_0 : i32, i32
  }
  func.func @transform_3(%arg0: i32) -> (i32, i32) {
    %c0_i32 = arith.constant 0 : i32
    %c0_i32_0 = arith.constant 0 : i32
    %c0_i32_1 = arith.constant 0 : i32
    return %c0_i32, %c0_i32_0 : i32, i32
  }
  func.func @transform_4(%arg0: i32) -> (i32, i32) {
    %c0_i32 = arith.constant 0 : i32
    %c0_i32_0 = arith.constant 0 : i32
    %c0_i32_1 = arith.constant 0 : i32
    return %c0_i32, %c0_i32_0 : i32, i32
  }
  func.func @transform_5(%arg0: i32) -> (i32, i32) {
    %c0_i32 = arith.constant 0 : i32
    %c0_i32_0 = arith.constant 0 : i32
    return %arg0, %c0_i32 : i32, i32
  }
}

</mosaic_0001>

<llo_original>
// kernel: tpu_custom_call.1
$region0: #{tpu_custom_call.1}
  #allocation0 [shape = 'u32[]', space=smem, size = 0x4, offset = 0x4, fixed_abs, tag = 'smem constant byte address 0x4 - core index']
  #allocation1 [shape = 'u32[72,128]{1,0:T(1,128)}', space=vmem, size = 0x9000, scoped, tag = 'internal scratch']
  %s0 = inlined_call_operand.hbm [shape: bf16[8,512], index: 0, kind: input, shape index: {}]
  %s1 = inlined_call_operand.hbm [shape: bf16[512,384], index: 1, kind: input, shape index: {}]
  %s2 = inlined_call_operand.hbm [shape: f32[1,384], index: 2, kind: input, shape index: {}]
  %s3 = inlined_call_operand.hbm [shape: bf16[384,128], index: 3, kind: input, shape index: {}]
  %s4 = inlined_call_operand.vmem [shape: f32[1,128], index: 4, kind: input, shape index: {}]
  %s5 = inlined_call_operand.hbm [shape: f32[8,128], index: 5, kind: output, shape index: {}]
  %s6 = sld [smem:[#allocation0]]
  $region46: #{tpu_custom_call.1} parent=0
    _
  %s8 = ssub.s32 1, %s6
  %s9 = scalar_select 0, %s8, %s6
  $region1: #{tpu_custom_call.1} parent=0
    #allocation2 [shape = 'u8[8192]{0}', space=vmem, size = 0x2000, scoped, tag = 'input window, operand 0, single buffered']
    #allocation3 [shape = 's32[1]{0}', space=sflag, size = 0x4, scoped, tag = 'scoped memory for tpu_custom_call.1']
    #allocation4 [shape = 's32[1]{0}', space=sflag, size = 0x4, scoped, tag = 'scoped memory for tpu_custom_call.1']
    #allocation5 [shape = 'u8[393216]{0}', space=vmem, size = 0x60000, scoped, tag = 'input window, operand 1, single buffered']
    #allocation6 [shape = 's32[1]{0}', space=sflag, size = 0x4, scoped, tag = 'scoped memory for tpu_custom_call.1']
    #allocation7 [shape = 'u8[1536]{0}', space=vmem, size = 0x800, scoped, tag = 'input window, operand 2, single buffered']
    #allocation8 [shape = 'u8[98304]{0}', space=vmem, size = 0x18000, scoped, tag = 'input window, operand 3, single buffered']
    #allocation9 [shape = 's32[1]{0}', space=sflag, size = 0x4, scoped, tag = 'scoped memory for tpu_custom_call.1']
    #allocation10 [shape = 'u8[4096]{0}', space=vmem, size = 0x1000, scoped, tag = 'output window, operand 0, single buffered']
    %10 = vsyncpa [#allocation3], 0
    %11 = vsyncpa [#allocation6], 0
    %12 = vsyncpa [#allocation9], 0
    %13 = vsyncpa [#allocation4], 0
    // Predicated region
    $region2: #{tpu_custom_call.1} parent=1 // pred_check
      _
    $region3: #{tpu_custom_call.1} parent=1 // pred_check_branch
      %15 = sbr.rel (0) target = $region5
    $region4: #{tpu_custom_call.1} parent=1 // pred_region
      %17 = vsyncadd [#allocation3], 0
      %s19 = sshll.u32 %s0, 4
      %s20 = int_to_ptr.hbm [resolvable:$true] %s19
      %s21 = sshll.u32 [#allocation2], 4
      %s22 = int_to_ptr.vmem [resolvable:$true] %s21
      %24 = dma.hbm_to_vmem [thread:$0]  %s20, 256, %s22, [#allocation3]
    $region5: #{tpu_custom_call.1} parent=1 // pred_fallthru
      _
    // Predicated region
    $region6: #{tpu_custom_call.1} parent=1 // pred_check
      _
    $region7: #{tpu_custom_call.1} parent=1 // pred_check_branch
      %26 = sbr.rel (0) target = $region9
    $region8: #{tpu_custom_call.1} parent=1 // pred_region
      %28 = vsyncadd [#allocation6], 0
      %s29 = sshll.u32 %s1, 4
      %s30 = int_to_ptr.hbm [resolvable:$true] %s29
      %s31 = sshll.u32 [#allocation5], 4
      %s32 = int_to_ptr.vmem [resolvable:$true] %s31
      %37 = dma.hbm_to_vmem [thread:$0]  %s30, 12288, %s32, [#allocation6], 192, 192, 12
    $region9: #{tpu_custom_call.1} parent=1 // pred_fallthru
      _
    // Predicated region
    $region10: #{tpu_custom_call.1} parent=1 // pred_check
      _
    $region11: #{tpu_custom_call.1} parent=1 // pred_check_branch
      %39 = sbr.rel (0) target = $region13
    $region12: #{tpu_custom_call.1} parent=1 // pred_region
      %41 = vsyncadd [#allocation6], 0
      %s43 = sshll.u32 %s2, 4
      %s44 = int_to_ptr.hbm [resolvable:$true] %s43
      %s45 = sshll.u32 [#allocation7], 4
      %s46 = int_to_ptr.vmem [resolvable:$true] %s45
      %48 = dma.hbm_to_vmem [thread:$0]  %s44, 48, %s46, [#allocation6]
    $region13: #{tpu_custom_call.1} parent=1 // pred_fallthru
      _
    // Predicated region
    $region14: #{tpu_custom_call.1} parent=1 // pred_check
      _
    $region15: #{tpu_custom_call.1} parent=1 // pred_check_branch
      %50 = sbr.rel (0) target = $region17
    $region16: #{tpu_custom_call.1} parent=1 // pred_region
      %52 = vsyncadd [#allocation9], 0
      %s53 = sshll.u32 %s3, 4
      %s54 = int_to_ptr.hbm [resolvable:$true] %s53
      %s55 = sshll.u32 [#allocation8], 4
      %s56 = int_to_ptr.vmem [resolvable:$true] %s55
      %61 = dma.hbm_to_vmem [thread:$0]  %s54, 3072, %s56, [#allocation9], 64, 64, 4
    $region17: #{tpu_custom_call.1} parent=1 // pred_fallthru
      _
    // Predicated region
    $region18: #{tpu_custom_call.1} parent=1 // pred_check
      _
    $region19: #{tpu_custom_call.1} parent=1 // pred_check_branch
      %63 = sbr.rel (0) target = $region21
    $region20: #{tpu_custom_call.1} parent=1 // pred_region
      _
    $region21: #{tpu_custom_call.1} parent=1 // pred_fallthru
      _
    // Predicated region
    $region22: #{tpu_custom_call.1} parent=1 // pred_check
      _
    $region23: #{tpu_custom_call.1} parent=1 // pred_check_branch
      %65 = sbr.rel (0) target = $region25
    $region24: #{tpu_custom_call.1} parent=1 // pred_region
      %67 = dma.done [#allocation3], 256
    $region25: #{tpu_custom_call.1} parent=1 // pred_fallthru
      _
    // Predicated region
    $region26: #{tpu_custom_call.1} parent=1 // pred_check
      _
    $region27: #{tpu_custom_call.1} parent=1 // pred_check_branch
      %69 = sbr.rel (0) target = $region29
    $region28: #{tpu_custom_call.1} parent=1 // pred_region
      %71 = dma.done [#allocation6], 12288
    $region29: #{tpu_custom_call.1} parent=1 // pred_fallthru
      _
    // Predicated region
    $region30: #{tpu_custom_call.1} parent=1 // pred_check
      _
    $region31: #{tpu_custom_call.1} parent=1 // pred_check_branch
      %73 = sbr.rel (0) target = $region33
    $region32: #{tpu_custom_call.1} parent=1 // pred_region
      %75 = dma.done [#allocation6], 48
    $region33: #{tpu_custom_call.1} parent=1 // pred_fallthru
      _
    // Predicated region
    $region34: #{tpu_custom_call.1} parent=1 // pred_check
      _
    $region35: #{tpu_custom_call.1} parent=1 // pred_check_branch
      %77 = sbr.rel (0) target = $region37
    $region36: #{tpu_custom_call.1} parent=1 // pred_region
      %79 = dma.done [#allocation9], 3072
    $region37: #{tpu_custom_call.1} parent=1 // pred_fallthru
      _
    %v80 = vld [vmem:[#allocation2] sm:$0xff]
    %v81 = vld [vmem:[#allocation2 + $0x8] sm:$0xff]
    %v82 = vld [vmem:[#allocation5] sm:$0xff]
    %v83 = vld [vmem:[#allocation5 + $0x8] sm:$0xf]
    %v84 = vld [vmem:[#allocation5 + $0xc] sm:$0xff]
    %v85 = vld [vmem:[#allocation5 + $0x14] sm:$0xf]
    %v86 = vld [vmem:[#allocation5 + $0x18] sm:$0xff]
    %v87 = vld [vmem:[#allocation5 + $0x20] sm:$0xf]
    %v88 = vld [vmem:[#allocation5 + $0x24] sm:$0xff]
    %v89 = vld [vmem:[#allocation5 + $0x2c] sm:$0xf]
    %v90 = vld [vmem:[#allocation5 + $0x30] sm:$0xff]
    %v91 = vld [vmem:[#allocation5 + $0x38] sm:$0xf]
    %v92 = vld [vmem:[#allocation5 + $0x3c] sm:$0xff]
    %v93 = vld [vmem:[#allocation5 + $0x44] sm:$0xf]
    %v94 = vld [vmem:[#allocation5 + $0x48] sm:$0xff]
    %v95 = vld [vmem:[#allocation5 + $0x50] sm:$0xf]
    %v96 = vld [vmem:[#allocation5 + $0x54] sm:$0xff]
    %v97 = vld [vmem:[#allocation5 + $0x5c] sm:$0xf]
    %v98 = vld [vmem:[#allocation5 + $0x60] sm:$0xff]
    %v99 = vld [vmem:[#allocation5 + $0x68] sm:$0xf]
    %v100 = vld [vmem:[#allocation5 + $0x6c] sm:$0xff]
    %v101 = vld [vmem:[#allocation5 + $0x74] sm:$0xf]
    %v102 = vld [vmem:[#allocation5 + $0x78] sm:$0xff]
    %v103 = vld [vmem:[#allocation5 + $0x80] sm:$0xf]
    %v104 = vld [vmem:[#allocation5 + $0x84] sm:$0xff]
    %v105 = vld [vmem:[#allocation5 + $0x8c] sm:$0xf]
    %v106 = vld [vmem:[#allocation5 + $0x90] sm:$0xff]
    %v107 = vld [vmem:[#allocation5 + $0x98] sm:$0xf]
    %v108 = vld [vmem:[#allocation5 + $0x9c] sm:$0xff]
    %v109 = vld [vmem:[#allocation5 + $0xa4] sm:$0xf]
    %v110 = vld [vmem:[#allocation5 + $0xa8] sm:$0xff]
    %v111 = vld [vmem:[#allocation5 + $0xb0] sm:$0xf]
    %v112 = vld [vmem:[#allocation5 + $0xb4] sm:$0xff]
    %v113 = vld [vmem:[#allocation5 + $0xbc] sm:$0xf]
    %v114 = vld [vmem:[#allocation5 + $0xc0] sm:$0xff]
    %v115 = vld [vmem:[#allocation5 + $0xc8] sm:$0xf]
    %v116 = vld [vmem:[#allocation5 + $0xcc] sm:$0xff]
    %v117 = vld [vmem:[#allocation5 + $0xd4] sm:$0xf]
    %v118 = vld [vmem:[#allocation5 + $0xd8] sm:$0xff]
    %v119 = vld [vmem:[#allocation5 + $0xe0] sm:$0xf]
    %v120 = vld [vmem:[#allocation5 + $0xe4] sm:$0xff]
    %v121 = vld [vmem:[#allocation5 + $0xec] sm:$0xf]
    %v122 = vld [vmem:[#allocation5 + $0xf0] sm:$0xff]
    %v123 = vld [vmem:[#allocation5 + $0xf8] sm:$0xf]
    %v124 = vld [vmem:[#allocation5 + $0xfc] sm:$0xff]
    %v125 = vld [vmem:[#allocation5 + $0x104] sm:$0xf]
    %v126 = vld [vmem:[#allocation5 + $0x108] sm:$0xff]
    %v127 = vld [vmem:[#allocation5 + $0x110] sm:$0xf]
    %v128 = vld [vmem:[#allocation5 + $0x114] sm:$0xff]
    %v129 = vld [vmem:[#allocation5 + $0x11c] sm:$0xf]
    %v130 = vld [vmem:[#allocation5 + $0x120] sm:$0xff]
    %v131 = vld [vmem:[#allocation5 + $0x128] sm:$0xf]
    %v132 = vld [vmem:[#allocation5 + $0x12c] sm:$0xff]
    %v133 = vld [vmem:[#allocation5 + $0x134] sm:$0xf]
    %v134 = vld [vmem:[#allocation5 + $0x138] sm:$0xff]
    %v135 = vld [vmem:[#allocation5 + $0x140] sm:$0xf]
    %v136 = vld [vmem:[#allocation5 + $0x144] sm:$0xff]
    %v137 = vld [vmem:[#allocation5 + $0x14c] sm:$0xf]
    %v138 = vld [vmem:[#allocation5 + $0x150] sm:$0xff]
    %v139 = vld [vmem:[#allocation5 + $0x158] sm:$0xf]
    %v140 = vld [vmem:[#allocation5 + $0x15c] sm:$0xff]
    %v141 = vld [vmem:[#allocation5 + $0x164] sm:$0xf]
    %v142 = vld [vmem:[#allocation5 + $0x168] sm:$0xff]
    %v143 = vld [vmem:[#allocation5 + $0x170] sm:$0xf]
    %v144 = vld [vmem:[#allocation5 + $0x174] sm:$0xff]
    %v145 = vld [vmem:[#allocation5 + $0x17c] sm:$0xf]
    %v146 = vld [vmem:[#allocation5 + $0x180] sm:$0xff]
    %v147 = vld [vmem:[#allocation5 + $0x188] sm:$0xf]
    %v148 = vld [vmem:[#allocation5 + $0x18c] sm:$0xff]
    %v149 = vld [vmem:[#allocation5 + $0x194] sm:$0xf]
    %v150 = vld [vmem:[#allocation5 + $0x198] sm:$0xff]
    %v151 = vld [vmem:[#allocation5 + $0x1a0] sm:$0xf]
    %v152 = vld [vmem:[#allocation5 + $0x1a4] sm:$0xff]
    %v153 = vld [vmem:[#allocation5 + $0x1ac] sm:$0xf]
    %v154 = vld [vmem:[#allocation5 + $0x1b0] sm:$0xff]
    %v155 = vld [vmem:[#allocation5 + $0x1b8] sm:$0xf]
    %v156 = vld [vmem:[#allocation5 + $0x1bc] sm:$0xff]
    %v157 = vld [vmem:[#allocation5 + $0x1c4] sm:$0xf]
    %v158 = vld [vmem:[#allocation5 + $0x1c8] sm:$0xff]
    %v159 = vld [vmem:[#allocation5 + $0x1d0] sm:$0xf]
    %v160 = vld [vmem:[#allocation5 + $0x1d4] sm:$0xff]
    %v161 = vld [vmem:[#allocation5 + $0x1dc] sm:$0xf]
    %v162 = vld [vmem:[#allocation5 + $0x1e0] sm:$0xff]
    %v163 = vld [vmem:[#allocation5 + $0x1e8] sm:$0xf]
    %v164 = vld [vmem:[#allocation5 + $0x1ec] sm:$0xff]
    %v165 = vld [vmem:[#allocation5 + $0x1f4] sm:$0xf]
    %v166 = vld [vmem:[#allocation5 + $0x1f8] sm:$0xff]
    %v167 = vld [vmem:[#allocation5 + $0x200] sm:$0xf]
    %v168 = vld [vmem:[#allocation5 + $0x204] sm:$0xff]
    %v169 = vld [vmem:[#allocation5 + $0x20c] sm:$0xf]
    %v170 = vld [vmem:[#allocation5 + $0x210] sm:$0xff]
    %v171 = vld [vmem:[#allocation5 + $0x218] sm:$0xf]
    %v172 = vld [vmem:[#allocation5 + $0x21c] sm:$0xff]
    %v173 = vld [vmem:[#allocation5 + $0x224] sm:$0xf]
    %v174 = vld [vmem:[#allocation5 + $0x228] sm:$0xff]
    %v175 = vld [vmem:[#allocation5 + $0x230] sm:$0xf]
    %v176 = vld [vmem:[#allocation5 + $0x234] sm:$0xff]
    %v177 = vld [vmem:[#allocation5 + $0x23c] sm:$0xf]
    %v178 = vld [vmem:[#allocation5 + $0x240] sm:$0xff]
    %v179 = vld [vmem:[#allocation5 + $0x248] sm:$0xf]
    %v180 = vld [vmem:[#allocation5 + $0x24c] sm:$0xff]
    %v181 = vld [vmem:[#allocation5 + $0x254] sm:$0xf]
    %v182 = vld [vmem:[#allocation5 + $0x258] sm:$0xff]
    %v183 = vld [vmem:[#allocation5 + $0x260] sm:$0xf]
    %v184 = vld [vmem:[#allocation5 + $0x264] sm:$0xff]
    %v185 = vld [vmem:[#allocation5 + $0x26c] sm:$0xf]
    %v186 = vld [vmem:[#allocation5 + $0x270] sm:$0xff]
    %v187 = vld [vmem:[#allocation5 + $0x278] sm:$0xf]
    %v188 = vld [vmem:[#allocation5 + $0x27c] sm:$0xff]
    %v189 = vld [vmem:[#allocation5 + $0x284] sm:$0xf]
    %v190 = vld [vmem:[#allocation5 + $0x288] sm:$0xff]
    %v191 = vld [vmem:[#allocation5 + $0x290] sm:$0xf]
    %v192 = vld [vmem:[#allocation5 + $0x294] sm:$0xff]
    %v193 = vld [vmem:[#allocation5 + $0x29c] sm:$0xf]
    %v194 = vld [vmem:[#allocation5 + $0x2a0] sm:$0xff]
    %v195 = vld [vmem:[#allocation5 + $0x2a8] sm:$0xf]
    %v196 = vld [vmem:[#allocation5 + $0x2ac] sm:$0xff]
    %v197 = vld [vmem:[#allocation5 + $0x2b4] sm:$0xf]
    %v198 = vld [vmem:[#allocation5 + $0x2b8] sm:$0xff]
    %v199 = vld [vmem:[#allocation5 + $0x2c0] sm:$0xf]
    %v200 = vld [vmem:[#allocation5 + $0x2c4] sm:$0xff]
    %v201 = vld [vmem:[#allocation5 + $0x2cc] sm:$0xf]
    %v202 = vld [vmem:[#allocation5 + $0x2d0] sm:$0xff]
    %v203 = vld [vmem:[#allocation5 + $0x2d8] sm:$0xf]
    %v204 = vld [vmem:[#allocation5 + $0x2dc] sm:$0xff]
    %v205 = vld [vmem:[#allocation5 + $0x2e4] sm:$0xf]
    %v206 = vld [vmem:[#allocation5 + $0x2e8] sm:$0xff]
    %v207 = vld [vmem:[#allocation5 + $0x2f0] sm:$0xf]
    %v208 = vld [vmem:[#allocation5 + $0x2f4] sm:$0xff]
    %v209 = vld [vmem:[#allocation5 + $0x2fc] sm:$0xf]
    %v210 = vld [vmem:[#allocation7] sm:$0x7]
    %v212 = vperm.slane %v210, 0
    %v213 = vperm.slane %v210, 1
    %v214 = vperm.slane %v210, 2
    %v220 = vunpack.c.l.b16 %v80
    %v221 = vunpack.c.h.b16 %v80
    %v222 = vunpack.c.l.b16 %v81
    %v223 = vunpack.c.h.b16 %v81
    %v224 = vpack.c.b16 %v220, %v220
    %v225 = vpack.c.b16 %v221, %v221
    %v226 = vpack.c.b16 %v222, %v222
    %v227 = vpack.c.b16 %v223, %v223
    %v360 = vunpack.c.l.b16 %v82
    %v361 = vunpack.c.h.b16 %v82
    %v362 = vunpack.c.l.b16 %v83
    %v363 = vunpack.c.l.b16 %v84
    %v364 = vunpack.c.h.b16 %v84
    %v365 = vunpack.c.l.b16 %v85
    %v366 = vunpack.c.l.b16 %v86
    %v367 = vunpack.c.h.b16 %v86
    %v368 = vunpack.c.l.b16 %v87
    %v369 = vunpack.c.l.b16 %v88
    %v370 = vunpack.c.h.b16 %v88
    %v371 = vunpack.c.l.b16 %v89
    %v372 = vunpack.c.l.b16 %v90
    %v373 = vunpack.c.h.b16 %v90
    %v374 = vunpack.c.l.b16 %v91
    %v375 = vunpack.c.l.b16 %v92
    %v376 = vunpack.c.h.b16 %v92
    %v377 = vunpack.c.l.b16 %v93
    %v378 = vunpack.c.l.b16 %v94
    %v379 = vunpack.c.h.b16 %v94
    %v380 = vunpack.c.l.b16 %v95
    %v381 = vunpack.c.l.b16 %v96
    %v382 = vunpack.c.h.b16 %v96
    %v383 = vunpack.c.l.b16 %v97
    %v384 = vunpack.c.l.b16 %v98
    %v385 = vunpack.c.h.b16 %v98
    %v386 = vunpack.c.l.b16 %v99
    %v387 = vunpack.c.l.b16 %v100
    %v388 = vunpack.c.h.b16 %v100
    %v389 = vunpack.c.l.b16 %v101
    %v390 = vunpack.c.l.b16 %v102
    %v391 = vunpack.c.h.b16 %v102
    %v392 = vunpack.c.l.b16 %v103
    %v393 = vunpack.c.l.b16 %v104
    %v394 = vunpack.c.h.b16 %v104
    %v395 = vunpack.c.l.b16 %v105
    %v396 = vunpack.c.l.b16 %v106
    %v397 = vunpack.c.h.b16 %v106
    %v398 = vunpack.c.l.b16 %v107
    %v399 = vunpack.c.l.b16 %v108
    %v400 = vunpack.c.h.b16 %v108
    %v401 = vunpack.c.l.b16 %v109
    %v402 = vunpack.c.l.b16 %v110
    %v403 = vunpack.c.h.b16 %v110
    %v404 = vunpack.c.l.b16 %v111
    %v405 = vunpack.c.l.b16 %v112
    %v406 = vunpack.c.h.b16 %v112
    %v407 = vunpack.c.l.b16 %v113
    %v408 = vunpack.c.l.b16 %v114
    %v409 = vunpack.c.h.b16 %v114
    %v410 = vunpack.c.l.b16 %v115
    %v411 = vunpack.c.l.b16 %v116
    %v412 = vunpack.c.h.b16 %v116
    %v413 = vunpack.c.l.b16 %v117
    %v414 = vunpack.c.l.b16 %v118
    %v415 = vunpack.c.h.b16 %v118
    %v416 = vunpack.c.l.b16 %v119
    %v417 = vunpack.c.l.b16 %v120
    %v418 = vunpack.c.h.b16 %v120
    %v419 = vunpack.c.l.b16 %v121
    %v420 = vunpack.c.l.b16 %v122
    %v421 = vunpack.c.h.b16 %v122
    %v422 = vunpack.c.l.b16 %v123
    %v423 = vunpack.c.l.b16 %v124
    %v424 = vunpack.c.h.b16 %v124
    %v425 = vunpack.c.l.b16 %v125
    %v426 = vunpack.c.l.b16 %v126
    %v427 = vunpack.c.h.b16 %v126
    %v428 = vunpack.c.l.b16 %v127
    %v429 = vunpack.c.l.b16 %v128
    %v430 = vunpack.c.h.b16 %v128
    %v431 = vunpack.c.l.b16 %v129
    %v432 = vunpack.c.l.b16 %v130
    %v433 = vunpack.c.h.b16 %v130
    %v434 = vunpack.c.l.b16 %v131
    %v435 = vunpack.c.l.b16 %v132
    %v436 = vunpack.c.h.b16 %v132
    %v437 = vunpack.c.l.b16 %v133
    %v438 = vunpack.c.l.b16 %v134
    %v439 = vunpack.c.h.b16 %v134
    %v440 = vunpack.c.l.b16 %v135
    %v441 = vunpack.c.l.b16 %v136
    %v442 = vunpack.c.h.b16 %v136
    %v443 = vunpack.c.l.b16 %v137
    %v444 = vunpack.c.l.b16 %v138
    %v445 = vunpack.c.h.b16 %v138
    %v446 = vunpack.c.l.b16 %v139
    %v447 = vunpack.c.l.b16 %v140
    %v448 = vunpack.c.h.b16 %v140
    %v449 = vunpack.c.l.b16 %v141
    %v450 = vunpack.c.l.b16 %v142
    %v451 = vunpack.c.h.b16 %v142
    %v452 = vunpack.c.l.b16 %v143
    %v453 = vunpack.c.l.b16 %v144
    %v454 = vunpack.c.h.b16 %v144
    %v455 = vunpack.c.l.b16 %v145
    %v456 = vunpack.c.l.b16 %v146
    %v457 = vunpack.c.h.b16 %v146
    %v458 = vunpack.c.l.b16 %v147
    %v459 = vunpack.c.l.b16 %v148
    %v460 = vunpack.c.h.b16 %v148
    %v461 = vunpack.c.l.b16 %v149
    %v462 = vunpack.c.l.b16 %v150
    %v463 = vunpack.c.h.b16 %v150
    %v464 = vunpack.c.l.b16 %v151
    %v465 = vunpack.c.l.b16 %v152
    %v466 = vunpack.c.h.b16 %v152
    %v467 = vunpack.c.l.b16 %v153
    %v468 = vunpack.c.l.b16 %v154
    %v469 = vunpack.c.h.b16 %v154
    %v470 = vunpack.c.l.b16 %v155
    %v471 = vunpack.c.l.b16 %v156
    %v472 = vunpack.c.h.b16 %v156
    %v473 = vunpack.c.l.b16 %v157
    %v474 = vunpack.c.l.b16 %v158
    %v475 = vunpack.c.h.b16 %v158
    %v476 = vunpack.c.l.b16 %v159
    %v477 = vunpack.c.l.b16 %v160
    %v478 = vunpack.c.h.b16 %v160
    %v479 = vunpack.c.l.b16 %v161
    %v480 = vunpack.c.l.b16 %v162
    %v481 = vunpack.c.h.b16 %v162
    %v482 = vunpack.c.l.b16 %v163
    %v483 = vunpack.c.l.b16 %v164
    %v484 = vunpack.c.h.b16 %v164
    %v485 = vunpack.c.l.b16 %v165
    %v486 = vunpack.c.l.b16 %v166
    %v487 = vunpack.c.h.b16 %v166
    %v488 = vunpack.c.l.b16 %v167
    %v489 = vunpack.c.l.b16 %v168
    %v490 = vunpack.c.h.b16 %v168
    %v491 = vunpack.c.l.b16 %v169
    %v492 = vunpack.c.l.b16 %v170
    %v493 = vunpack.c.h.b16 %v170
    %v494 = vunpack.c.l.b16 %v171
    %v495 = vunpack.c.l.b16 %v172
    %v496 = vunpack.c.h.b16 %v172
    %v497 = vunpack.c.l.b16 %v173
    %v498 = vunpack.c.l.b16 %v174
    %v499 = vunpack.c.h.b16 %v174
    %v500 = vunpack.c.l.b16 %v175
    %v501 = vunpack.c.l.b16 %v176
    %v502 = vunpack.c.h.b16 %v176
    %v503 = vunpack.c.l.b16 %v177
    %v504 = vunpack.c.l.b16 %v178
    %v505 = vunpack.c.h.b16 %v178
    %v506 = vunpack.c.l.b16 %v179
    %v507 = vunpack.c.l.b16 %v180
    %v508 = vunpack.c.h.b16 %v180
    %v509 = vunpack.c.l.b16 %v181
    %v510 = vunpack.c.l.b16 %v182
    %v511 = vunpack.c.h.b16 %v182
    %v512 = vunpack.c.l.b16 %v183
    %v513 = vunpack.c.l.b16 %v184
    %v514 = vunpack.c.h.b16 %v184
    %v515 = vunpack.c.l.b16 %v185
    %v516 = vunpack.c.l.b16 %v186
    %v517 = vunpack.c.h.b16 %v186
    %v518 = vunpack.c.l.b16 %v187
    %v519 = vunpack.c.l.b16 %v188
    %v520 = vunpack.c.h.b16 %v188
    %v521 = vunpack.c.l.b16 %v189
    %v522 = vunpack.c.l.b16 %v190
    %v523 = vunpack.c.h.b16 %v190
    %v524 = vunpack.c.l.b16 %v191
    %v525 = vunpack.c.l.b16 %v192
    %v526 = vunpack.c.h.b16 %v192
    %v527 = vunpack.c.l.b16 %v193
    %v528 = vunpack.c.l.b16 %v194
    %v529 = vunpack.c.h.b16 %v194
    %v530 = vunpack.c.l.b16 %v195
    %v531 = vunpack.c.l.b16 %v196
    %v532 = vunpack.c.h.b16 %v196
    %v533 = vunpack.c.l.b16 %v197
    %v534 = vunpack.c.l.b16 %v198
    %v535 = vunpack.c.h.b16 %v198
    %v536 = vunpack.c.l.b16 %v199
    %v537 = vunpack.c.l.b16 %v200
    %v538 = vunpack.c.h.b16 %v200
    %v539 = vunpack.c.l.b16 %v201
    %v540 = vunpack.c.l.b16 %v202
    %v541 = vunpack.c.h.b16 %v202
    %v542 = vunpack.c.l.b16 %v203
    %v543 = vunpack.c.l.b16 %v204
    %v544 = vunpack.c.h.b16 %v204
    %v545 = vunpack.c.l.b16 %v205
    %v546 = vunpack.c.l.b16 %v206
    %v547 = vunpack.c.h.b16 %v206
    %v548 = vunpack.c.l.b16 %v207
    %v549 = vunpack.c.l.b16 %v208
    %v550 = vunpack.c.h.b16 %v208
    %v551 = vunpack.c.l.b16 %v209
    %v552 = vpack.c.b16 %v363, %v360
    %v553 = vpack.c.b16 %v364, %v361
    %v554 = vpack.c.b16 %v365, %v362
    %v555 = vpack.c.b16 %v369, %v366
    %v556 = vpack.c.b16 %v370, %v367
    %v557 = vpack.c.b16 %v371, %v368
    %v558 = vpack.c.b16 %v375, %v372
    %v559 = vpack.c.b16 %v376, %v373
    %v560 = vpack.c.b16 %v377, %v374
    %v561 = vpack.c.b16 %v381, %v378
    %v562 = vpack.c.b16 %v382, %v379
    %v563 = vpack.c.b16 %v383, %v380
    %v564 = vpack.c.b16 %v387, %v384
    %v565 = vpack.c.b16 %v388, %v385
    %v566 = vpack.c.b16 %v389, %v386
    %v567 = vpack.c.b16 %v393, %v390
    %v568 = vpack.c.b16 %v394, %v391
    %v569 = vpack.c.b16 %v395, %v392
    %v570 = vpack.c.b16 %v399, %v396
    %v571 = vpack.c.b16 %v400, %v397
    %v572 = vpack.c.b16 %v401, %v398
    %v573 = vpack.c.b16 %v405, %v402
    %v574 = vpack.c.b16 %v406, %v403
    %v575 = vpack.c.b16 %v407, %v404
    %v576 = vpack.c.b16 %v411, %v408
    %v577 = vpack.c.b16 %v412, %v409
    %v578 = vpack.c.b16 %v413, %v410
    %v579 = vpack.c.b16 %v417, %v414
    %v580 = vpack.c.b16 %v418, %v415
    %v581 = vpack.c.b16 %v419, %v416
    %v582 = vpack.c.b16 %v423, %v420
    %v583 = vpack.c.b16 %v424, %v421
    %v584 = vpack.c.b16 %v425, %v422
    %v585 = vpack.c.b16 %v429, %v426
    %v586 = vpack.c.b16 %v430, %v427
    %v587 = vpack.c.b16 %v431, %v428
    %v588 = vpack.c.b16 %v435, %v432
    %v589 = vpack.c.b16 %v436, %v433
    %v590 = vpack.c.b16 %v437, %v434
    %v591 = vpack.c.b16 %v441, %v438
    %v592 = vpack.c.b16 %v442, %v439
    %v593 = vpack.c.b16 %v443, %v440
    %v594 = vpack.c.b16 %v447, %v444
    %v595 = vpack.c.b16 %v448, %v445
    %v596 = vpack.c.b16 %v449, %v446
    %v597 = vpack.c.b16 %v453, %v450
    %v598 = vpack.c.b16 %v454, %v451
    %v599 = vpack.c.b16 %v455, %v452
    %v600 = vpack.c.b16 %v459, %v456
    %v601 = vpack.c.b16 %v460, %v457
    %v602 = vpack.c.b16 %v461, %v458
    %v603 = vpack.c.b16 %v465, %v462
    %v604 = vpack.c.b16 %v466, %v463
    %v605 = vpack.c.b16 %v467, %v464
    %v606 = vpack.c.b16 %v471, %v468
    %v607 = vpack.c.b16 %v472, %v469
    %v608 = vpack.c.b16 %v473, %v470
    %v609 = vpack.c.b16 %v477, %v474
    %v610 = vpack.c.b16 %v478, %v475
    %v611 = vpack.c.b16 %v479, %v476
    %v612 = vpack.c.b16 %v483, %v480
    %v613 = vpack.c.b16 %v484, %v481
    %v614 = vpack.c.b16 %v485, %v482
    %v615 = vpack.c.b16 %v489, %v486
    %v616 = vpack.c.b16 %v490, %v487
    %v617 = vpack.c.b16 %v491, %v488
    %v618 = vpack.c.b16 %v495, %v492
    %v619 = vpack.c.b16 %v496, %v493
    %v620 = vpack.c.b16 %v497, %v494
    %v621 = vpack.c.b16 %v501, %v498
    %v622 = vpack.c.b16 %v502, %v499
    %v623 = vpack.c.b16 %v503, %v500
    %v624 = vpack.c.b16 %v507, %v504
    %v625 = vpack.c.b16 %v508, %v505
    %v626 = vpack.c.b16 %v509, %v506
    %v627 = vpack.c.b16 %v513, %v510
    %v628 = vpack.c.b16 %v514, %v511
    %v629 = vpack.c.b16 %v515, %v512
    %v630 = vpack.c.b16 %v519, %v516
    %v631 = vpack.c.b16 %v520, %v517
    %v632 = vpack.c.b16 %v521, %v518
    %v633 = vpack.c.b16 %v525, %v522
    %v634 = vpack.c.b16 %v526, %v523
    %v635 = vpack.c.b16 %v527, %v524
    %v636 = vpack.c.b16 %v531, %v528
    %v637 = vpack.c.b16 %v532, %v529
    %v638 = vpack.c.b16 %v533, %v530
    %v639 = vpack.c.b16 %v537, %v534
    %v640 = vpack.c.b16 %v538, %v535
    %v641 = vpack.c.b16 %v539, %v536
    %v642 = vpack.c.b16 %v543, %v540
    %v643 = vpack.c.b16 %v544, %v541
    %v644 = vpack.c.b16 %v545, %v542
    %v645 = vpack.c.b16 %v549, %v546
    %v646 = vpack.c.b16 %v550, %v547
    %v647 = vpack.c.b16 %v551, %v548
    %744 = vmatpush.bf16.msra.mxu0 %v573
    %745 = vmatpush.bf16.msra.mxu0 %v570
    %746 = vmatpush.bf16.msra.mxu0 %v567
    %747 = vmatpush.bf16.msra.mxu0 %v564
    %748 = vmatpush.bf16.msra.mxu0 %v561
    %749 = vmatpush.bf16.msra.mxu0 %v558
    %750 = vmatpush.bf16.msra.mxu0 %v555
    %751 = vmatpush.bf16.msra.mxu0 %v552
    %752 = vmatmul.bf16.gmra.mxu0 %v224
    %v753 = vpop.f32.mrf.mxu0
    %v754 = vadd.f32 %v212, %v753
    %v755 = vpop.f32.mrf.mxu0
    %756 = vdwg.mxu0
    %757 = vmatpush.bf16.msra.mxu0 %v597
    %758 = vmatpush.bf16.msra.mxu0 %v594
    %759 = vmatpush.bf16.msra.mxu0 %v591
    %760 = vmatpush.bf16.msra.mxu0 %v588
    %761 = vmatpush.bf16.msra.mxu0 %v585
    %762 = vmatpush.bf16.msra.mxu0 %v582
    %763 = vmatpush.bf16.msra.mxu0 %v579
    %764 = vmatpush.bf16.msra.mxu0 %v576
    %765 = vmatmul.bf16.gmra.mxu0 %v225
    %v766 = vpop.f32.mrf.mxu0
    %v767 = vadd.f32 %v754, %v766
    %v768 = vpop.f32.mrf.mxu0
    %769 = vdwg.mxu0
    %770 = vmatpush.bf16.msra.mxu0 %v621
    %771 = vmatpush.bf16.msra.mxu0 %v618
    %772 = vmatpush.bf16.msra.mxu0 %v615
    %773 = vmatpush.bf16.msra.mxu0 %v612
    %774 = vmatpush.bf16.msra.mxu0 %v609
    %775 = vmatpush.bf16.msra.mxu0 %v606
    %776 = vmatpush.bf16.msra.mxu0 %v603
    %777 = vmatpush.bf16.msra.mxu0 %v600
    %778 = vmatmul.bf16.gmra.mxu0 %v226
    %v779 = vpop.f32.mrf.mxu0
    %v780 = vadd.f32 %v767, %v779
    %v781 = vpop.f32.mrf.mxu0
    %782 = vdwg.mxu0
    %783 = vmatpush.bf16.msra.mxu0 %v645
    %784 = vmatpush.bf16.msra.mxu0 %v642
    %785 = vmatpush.bf16.msra.mxu0 %v639
    %786 = vmatpush.bf16.msra.mxu0 %v636
    %787 = vmatpush.bf16.msra.mxu0 %v633
    %788 = vmatpush.bf16.msra.mxu0 %v630
    %789 = vmatpush.bf16.msra.mxu0 %v627
    %790 = vmatpush.bf16.msra.mxu0 %v624
    %791 = vmatmul.bf16.gmra.mxu0 %v227
    %v792 = vpop.f32.mrf.mxu0
    %v793 = vadd.f32 %v780, %v792
    %v794 = vpop.f32.mrf.mxu0
    %795 = vdwg.mxu0
    %796 = vmatpush.bf16.msra.mxu0 %v574
    %797 = vmatpush.bf16.msra.mxu0 %v571
    %798 = vmatpush.bf16.msra.mxu0 %v568
    %799 = vmatpush.bf16.msra.mxu0 %v565
    %800 = vmatpush.bf16.msra.mxu0 %v562
    %801 = vmatpush.bf16.msra.mxu0 %v559
    %802 = vmatpush.bf16.msra.mxu0 %v556
    %803 = vmatpush.bf16.msra.mxu0 %v553
    %804 = vmatmul.bf16.gmra.mxu0 %v224
    %v805 = vpop.f32.mrf.mxu0
    %v806 = vadd.f32 %v213, %v805
    %v807 = vpop.f32.mrf.mxu0
    %808 = vdwg.mxu0
    %809 = vmatpush.bf16.msra.mxu0 %v598
    %810 = vmatpush.bf16.msra.mxu0 %v595
    %811 = vmatpush.bf16.msra.mxu0 %v592
    %812 = vmatpush.bf16.msra.mxu0 %v589
    %813 = vmatpush.bf16.msra.mxu0 %v586
    %814 = vmatpush.bf16.msra.mxu0 %v583
    %815 = vmatpush.bf16.msra.mxu0 %v580
    %816 = vmatpush.bf16.msra.mxu0 %v577
    %817 = vmatmul.bf16.gmra.mxu0 %v225
    %v818 = vpop.f32.mrf.mxu0
    %v819 = vadd.f32 %v806, %v818
    %v820 = vpop.f32.mrf.mxu0
    %821 = vdwg.mxu0
    %822 = vmatpush.bf16.msra.mxu0 %v622
    %823 = vmatpush.bf16.msra.mxu0 %v619
    %824 = vmatpush.bf16.msra.mxu0 %v616
    %825 = vmatpush.bf16.msra.mxu0 %v613
    %826 = vmatpush.bf16.msra.mxu0 %v610
    %827 = vmatpush.bf16.msra.mxu0 %v607
    %828 = vmatpush.bf16.msra.mxu0 %v604
    %829 = vmatpush.bf16.msra.mxu0 %v601
    %830 = vmatmul.bf16.gmra.mxu0 %v226
    %v831 = vpop.f32.mrf.mxu0
    %v832 = vadd.f32 %v819, %v831
    %v833 = vpop.f32.mrf.mxu0
    %834 = vdwg.mxu0
    %835 = vmatpush.bf16.msra.mxu0 %v646
    %836 = vmatpush.bf16.msra.mxu0 %v643
    %837 = vmatpush.bf16.msra.mxu0 %v640
    %838 = vmatpush.bf16.msra.mxu0 %v637
    %839 = vmatpush.bf16.msra.mxu0 %v634
    %840 = vmatpush.bf16.msra.mxu0 %v631
    %841 = vmatpush.bf16.msra.mxu0 %v628
    %842 = vmatpush.bf16.msra.mxu0 %v625
    %843 = vmatmul.bf16.gmra.mxu0 %v227
    %v844 = vpop.f32.mrf.mxu0
    %v845 = vadd.f32 %v832, %v844
    %v846 = vpop.f32.mrf.mxu0
    %847 = vdwg.mxu0
    %848 = vmatpush.bf16.msra.mxu0 %v575
    %849 = vmatpush.bf16.msra.mxu0 %v572
    %850 = vmatpush.bf16.msra.mxu0 %v569
    %851 = vmatpush.bf16.msra.mxu0 %v566
    %852 = vmatpush.bf16.msra.mxu0 %v563
    %853 = vmatpush.bf16.msra.mxu0 %v560
    %854 = vmatpush.bf16.msra.mxu0 %v557
    %855 = vmatpush.bf16.msra.mxu0 %v554
    %856 = vmatmul.bf16.gmra.mxu0 %v224
    %v857 = vpop.f32.mrf.mxu0
    %v858 = vadd.f32 %v214, %v857
    %v859 = vpop.f32.mrf.mxu0
    %860 = vdwg.mxu0
    %861 = vmatpush.bf16.msra.mxu0 %v599
    %862 = vmatpush.bf16.msra.mxu0 %v596
    %863 = vmatpush.bf16.msra.mxu0 %v593
    %864 = vmatpush.bf16.msra.mxu0 %v590
    %865 = vmatpush.bf16.msra.mxu0 %v587
    %866 = vmatpush.bf16.msra.mxu0 %v584
    %867 = vmatpush.bf16.msra.mxu0 %v581
    %868 = vmatpush.bf16.msra.mxu0 %v578
    %869 = vmatmul.bf16.gmra.mxu0 %v225
    %v870 = vpop.f32.mrf.mxu0
    %v871 = vadd.f32 %v858, %v870
    %v872 = vpop.f32.mrf.mxu0
    %873 = vdwg.mxu0
    %874 = vmatpush.bf16.msra.mxu0 %v623
    %875 = vmatpush.bf16.msra.mxu0 %v620
    %876 = vmatpush.bf16.msra.mxu0 %v617
    %877 = vmatpush.bf16.msra.mxu0 %v614
    %878 = vmatpush.bf16.msra.mxu0 %v611
    %879 = vmatpush.bf16.msra.mxu0 %v608
    %880 = vmatpush.bf16.msra.mxu0 %v605
    %881 = vmatpush.bf16.msra.mxu0 %v602
    %882 = vmatmul.bf16.gmra.mxu0 %v226
    %v883 = vpop.f32.mrf.mxu0
    %v884 = vadd.f32 %v871, %v883
    %v885 = vpop.f32.mrf.mxu0
    %886 = vdwg.mxu0
    %887 = vmatpush.bf16.msra.mxu0 %v647
    %888 = vmatpush.bf16.msra.mxu0 %v644
    %889 = vmatpush.bf16.msra.mxu0 %v641
    %890 = vmatpush.bf16.msra.mxu0 %v638
    %891 = vmatpush.bf16.msra.mxu0 %v635
    %892 = vmatpush.bf16.msra.mxu0 %v632
    %893 = vmatpush.bf16.msra.mxu0 %v629
    %894 = vmatpush.bf16.msra.mxu0 %v626
    %895 = vmatmul.bf16.gmra.mxu0 %v227
    %v896 = vpop.f32.mrf.mxu0
    %v897 = vadd.f32 %v884, %v896
    %v898 = vpop.f32.mrf.mxu0
    %899 = vdwg.mxu0
    %v900 = vmax.f32 %v793, 0.0
    %v901 = vmax.f32 %v845, 0.0
    %v902 = vmax.f32 %v897, 0.0
    %v903 = vpack.c.bf16 %v900, %v900
    %v904 = vpack.c.bf16 %v901, %v901
    %v905 = vpack.c.bf16 %v902, %v902
    %v906 = vld [vmem:[#allocation8] sm:$0xf]
    %v907 = vld [vmem:[#allocation8 + $0x4] sm:$0xf]
    %v908 = vld [vmem:[#allocation8 + $0x8] sm:$0xf]
    %v909 = vld [vmem:[#allocation8 + $0xc] sm:$0xf]
    %v910 = vld [vmem:[#allocation8 + $0x10] sm:$0xf]
    %v911 = vld [vmem:[#allocation8 + $0x14] sm:$0xf]
    %v912 = vld [vmem:[#allocation8 + $0x18] sm:$0xf]
    %v913 = vld [vmem:[#allocation8 + $0x1c] sm:$0xf]
    %v914 = vld [vmem:[#allocation8 + $0x20] sm:$0xf]
    %v915 = vld [vmem:[#allocation8 + $0x24] sm:$0xf]
    %v916 = vld [vmem:[#allocation8 + $0x28] sm:$0xf]
    %v917 = vld [vmem:[#allocation8 + $0x2c] sm:$0xf]
    %v918 = vld [vmem:[#allocation8 + $0x30] sm:$0xf]
    %v919 = vld [vmem:[#allocation8 + $0x34] sm:$0xf]
    %v920 = vld [vmem:[#allocation8 + $0x38] sm:$0xf]
    %v921 = vld [vmem:[#allocation8 + $0x3c] sm:$0xf]
    %v922 = vld [vmem:[#allocation8 + $0x40] sm:$0xf]
    %v923 = vld [vmem:[#allocation8 + $0x44] sm:$0xf]
    %v924 = vld [vmem:[#allocation8 + $0x48] sm:$0xf]
    %v925 = vld [vmem:[#allocation8 + $0x4c] sm:$0xf]
    %v926 = vld [vmem:[#allocation8 + $0x50] sm:$0xf]
    %v927 = vld [vmem:[#allocation8 + $0x54] sm:$0xf]
    %v928 = vld [vmem:[#allocation8 + $0x58] sm:$0xf]
    %v929 = vld [vmem:[#allocation8 + $0x5c] sm:$0xf]
    %v930 = vld [vmem:[#allocation8 + $0x60] sm:$0xf]
    %v931 = vld [vmem:[#allocation8 + $0x64] sm:$0xf]
    %v932 = vld [vmem:[#allocation8 + $0x68] sm:$0xf]
    %v933 = vld [vmem:[#allocation8 + $0x6c] sm:$0xf]
    %v934 = vld [vmem:[#allocation8 + $0x70] sm:$0xf]
    %v935 = vld [vmem:[#allocation8 + $0x74] sm:$0xf]
    %v936 = vld [vmem:[#allocation8 + $0x78] sm:$0xf]
    %v937 = vld [vmem:[#allocation8 + $0x7c] sm:$0xf]
    %v938 = vld [vmem:[#allocation8 + $0x80] sm:$0xf]
    %v939 = vld [vmem:[#allocation8 + $0x84] sm:$0xf]
    %v940 = vld [vmem:[#allocation8 + $0x88] sm:$0xf]
    %v941 = vld [vmem:[#allocation8 + $0x8c] sm:$0xf]
    %v942 = vld [vmem:[#allocation8 + $0x90] sm:$0xf]
    %v943 = vld [vmem:[#allocation8 + $0x94] sm:$0xf]
    %v944 = vld [vmem:[#allocation8 + $0x98] sm:$0xf]
    %v945 = vld [vmem:[#allocation8 + $0x9c] sm:$0xf]
    %v946 = vld [vmem:[#allocation8 + $0xa0] sm:$0xf]
    %v947 = vld [vmem:[#allocation8 + $0xa4] sm:$0xf]
    %v948 = vld [vmem:[#allocation8 + $0xa8] sm:$0xf]
    %v949 = vld [vmem:[#allocation8 + $0xac] sm:$0xf]
    %v950 = vld [vmem:[#allocation8 + $0xb0] sm:$0xf]
    %v951 = vld [vmem:[#allocation8 + $0xb4] sm:$0xf]
    %v952 = vld [vmem:[#allocation8 + $0xb8] sm:$0xf]
    %v953 = vld [vmem:[#allocation8 + $0xbc] sm:$0xf]
    %v954 = vld [vmem:[%s4] sm:$0x1]
    %v956 = vperm.slane %v954, 0
    %v1006 = vunpack.c.l.b16 %v906
    %v1007 = vunpack.c.l.b16 %v907
    %v1008 = vunpack.c.l.b16 %v908
    %v1009 = vunpack.c.l.b16 %v909
    %v1010 = vunpack.c.l.b16 %v910
    %v1011 = vunpack.c.l.b16 %v911
    %v1012 = vunpack.c.l.b16 %v912
    %v1013 = vunpack.c.l.b16 %v913
    %v1014 = vunpack.c.l.b16 %v914
    %v1015 = vunpack.c.l.b16 %v915
    %v1016 = vunpack.c.l.b16 %v916
    %v1017 = vunpack.c.l.b16 %v917
    %v1018 = vunpack.c.l.b16 %v918
    %v1019 = vunpack.c.l.b16 %v919
    %v1020 = vunpack.c.l.b16 %v920
    %v1021 = vunpack.c.l.b16 %v921
    %v1022 = vunpack.c.l.b16 %v922
    %v1023 = vunpack.c.l.b16 %v923
    %v1024 = vunpack.c.l.b16 %v924
    %v1025 = vunpack.c.l.b16 %v925
    %v1026 = vunpack.c.l.b16 %v926
    %v1027 = vunpack.c.l.b16 %v927
    %v1028 = vunpack.c.l.b16 %v928
    %v1029 = vunpack.c.l.b16 %v929
    %v1030 = vunpack.c.l.b16 %v930
    %v1031 = vunpack.c.l.b16 %v931
    %v1032 = vunpack.c.l.b16 %v932
    %v1033 = vunpack.c.l.b16 %v933
    %v1034 = vunpack.c.l.b16 %v934
    %v1035 = vunpack.c.l.b16 %v935
    %v1036 = vunpack.c.l.b16 %v936
    %v1037 = vunpack.c.l.b16 %v937
    %v1038 = vunpack.c.l.b16 %v938
    %v1039 = vunpack.c.l.b16 %v939
    %v1040 = vunpack.c.l.b16 %v940
    %v1041 = vunpack.c.l.b16 %v941
    %v1042 = vunpack.c.l.b16 %v942
    %v1043 = vunpack.c.l.b16 %v943
    %v1044 = vunpack.c.l.b16 %v944
    %v1045 = vunpack.c.l.b16 %v945
    %v1046 = vunpack.c.l.b16 %v946
    %v1047 = vunpack.c.l.b16 %v947
    %v1048 = vunpack.c.l.b16 %v948
    %v1049 = vunpack.c.l.b16 %v949
    %v1050 = vunpack.c.l.b16 %v950
    %v1051 = vunpack.c.l.b16 %v951
    %v1052 = vunpack.c.l.b16 %v952
    %v1053 = vunpack.c.l.b16 %v953
    %v1054 = vpack.c.b16 %v1007, %v1006
    %v1055 = vpack.c.b16 %v1009, %v1008
    %v1056 = vpack.c.b16 %v1011, %v1010
    %v1057 = vpack.c.b16 %v1013, %v1012
    %v1058 = vpack.c.b16 %v1015, %v1014
    %v1059 = vpack.c.b16 %v1017, %v1016
    %v1060 = vpack.c.b16 %v1019, %v1018
    %v1061 = vpack.c.b16 %v1021, %v1020
    %v1062 = vpack.c.b16 %v1023, %v1022
    %v1063 = vpack.c.b16 %v1025, %v1024
    %v1064 = vpack.c.b16 %v1027, %v1026
    %v1065 = vpack.c.b16 %v1029, %v1028
    %v1066 = vpack.c.b16 %v1031, %v1030
    %v1067 = vpack.c.b16 %v1033, %v1032
    %v1068 = vpack.c.b16 %v1035, %v1034
    %v1069 = vpack.c.b16 %v1037, %v1036
    %v1070 = vpack.c.b16 %v1039, %v1038
    %v1071 = vpack.c.b16 %v1041, %v1040
    %v1072 = vpack.c.b16 %v1043, %v1042
    %v1073 = vpack.c.b16 %v1045, %v1044
    %v1074 = vpack.c.b16 %v1047, %v1046
    %v1075 = vpack.c.b16 %v1049, %v1048
    %v1076 = vpack.c.b16 %v1051, %v1050
    %v1077 = vpack.c.b16 %v1053, %v1052
    %1102 = vmatpush.bf16.msra.mxu0 %v1061
    %1103 = vmatpush.bf16.msra.mxu0 %v1060
    %1104 = vmatpush.bf16.msra.mxu0 %v1059
    %1105 = vmatpush.bf16.msra.mxu0 %v1058
    %1106 = vmatpush.bf16.msra.mxu0 %v1057
    %1107 = vmatpush.bf16.msra.mxu0 %v1056
    %1108 = vmatpush.bf16.msra.mxu0 %v1055
    %1109 = vmatpush.bf16.msra.mxu0 %v1054
    %1110 = vmatmul.bf16.gmra.mxu0 %v903
    %v1111 = vpop.f32.mrf.mxu0
    %v1112 = vadd.f32 %v956, %v1111
    %v1113 = vpop.f32.mrf.mxu0
    %1114 = vdwg.mxu0
    %1115 = vmatpush.bf16.msra.mxu0 %v1069
    %1116 = vmatpush.bf16.msra.mxu0 %v1068
    %1117 = vmatpush.bf16.msra.mxu0 %v1067
    %1118 = vmatpush.bf16.msra.mxu0 %v1066
    %1119 = vmatpush.bf16.msra.mxu0 %v1065
    %1120 = vmatpush.bf16.msra.mxu0 %v1064
    %1121 = vmatpush.bf16.msra.mxu0 %v1063
    %1122 = vmatpush.bf16.msra.mxu0 %v1062
    %1123 = vmatmul.bf16.gmra.mxu0 %v904
    %v1124 = vpop.f32.mrf.mxu0
    %v1125 = vadd.f32 %v1112, %v1124
    %v1126 = vpop.f32.mrf.mxu0
    %1127 = vdwg.mxu0
    %1128 = vmatpush.bf16.msra.mxu0 %v1077
    %1129 = vmatpush.bf16.msra.mxu0 %v1076
    %1130 = vmatpush.bf16.msra.mxu0 %v1075
    %1131 = vmatpush.bf16.msra.mxu0 %v1074
    %1132 = vmatpush.bf16.msra.mxu0 %v1073
    %1133 = vmatpush.bf16.msra.mxu0 %v1072
    %1134 = vmatpush.bf16.msra.mxu0 %v1071
    %1135 = vmatpush.bf16.msra.mxu0 %v1070
    %1136 = vmatmul.bf16.gmra.mxu0 %v905
    %v1137 = vpop.f32.mrf.mxu0
    %v1138 = vadd.f32 %v1125, %v1137
    %v1139 = vpop.f32.mrf.mxu0
    %1140 = vdwg.mxu0
    %1141 = vst [vmem:[#allocation10] sm:$0xff] %v1138
    // Predicated region
    $region38: #{tpu_custom_call.1} parent=1 // pred_check
      _
    $region39: #{tpu_custom_call.1} parent=1 // pred_check_branch
      %1143 = sbr.rel (0) target = $region41
    $region40: #{tpu_custom_call.1} parent=1 // pred_region
      %1145 = vsyncadd [#allocation4], 0
      %s1147 = sshll.u32 [#allocation10], 4
      %s1148 = int_to_ptr.vmem [resolvable:$true] %s1147
      %s1149 = sshll.u32 %s5, 4
      %s1150 = int_to_ptr.hbm [resolvable:$true] %s1149
      %1152 = dma.vmem_to_hbm [thread:$0]  %s1148, 128, %s1150, [#allocation4]
    $region41: #{tpu_custom_call.1} parent=1 // pred_fallthru
      _
    // Predicated region
    $region42: #{tpu_custom_call.1} parent=1 // pred_check
      _
    $region43: #{tpu_custom_call.1} parent=1 // pred_check_branch
      %1154 = sbr.rel (0) target = $region45
    $region44: #{tpu_custom_call.1} parent=1 // pred_region
      %1156 = dma.done [#allocation4], 128
    $region45: #{tpu_custom_call.1} parent=1 // pred_fallthru
      _
    %1157 = vsyncpa [#allocation3], 1
    %1158 = vsyncpa [#allocation6], 1
    %1159 = vsyncpa [#allocation9], 1
    %1160 = vsyncpa [#allocation4], 1

</llo_original>
